<compile_context>
chip_gen: v5e
topology: v5e:2x2
jax: 0.10.0
libtpu: 0.0.40
codegen_flags: <defaults>
</compile_context>

<pallas_src>
from functools import partial

import jax
import jax.numpy as jnp
from jax.experimental import pallas as pl
from jax.experimental.pallas import tpu as pltpu

# Deterministic parameters per F0ProcessorCell_RNN.__init__
FRAME_RATE = 250.0
RELEASE_DURATION = 1.0  # nn.Parameter(torch.tensor([1.0]), requires_grad=False)

LANES = 128
SUBLANES = 8
# 2048 rows * 128 lanes * 4 B = 1 MiB per block;
# (3 inputs + 1 output) * 2 pipeline buffers = 8 MiB, well under the default
# scoped-VMEM limit on every chip (16 MiB v5e, 32 MiB v6e/v7x).
MAX_BLOCK_ROWS = 2048


def _ceil_div(a, b):
    return -(-a // b)


def _round_up(a, b):
    return _ceil_div(a, b) * b


def _note_release_kernel(pitch_ref, note0_ref, steps0_ref, out_ref, *,
                         last_step, thresh):
    """Closed-form NoteRelease update: a single VPU elementwise pass per tile."""
    pitch = pitch_ref[...]                               # (tb, 128) f32
    # Steps value seen by the final loop iteration for a never-active pitch.
    # The loop adds 1.0 per frame; a single fused add reproduces its comparison
    # (identical away from the measure-zero float boundary at `thresh`).
    steps_last = steps0_ref[...] + last_step
    released = jnp.where(steps_last > thresh, 0.0, note0_ref[...])
    out_ref[...] = jnp.where(pitch > 0.0, pitch, released)


def note_release(conditioning, init_state, *, block_rows=None):
    """NoteRelease forward.

    Args:
      conditioning: (batch, n_frames, 2) float32.
      init_state:   (batch, n_frames, 2) float32 — the random `previous_state`
                    the PyTorch module draws with torch.randn(...).
    Returns:
      extended_pitch: (batch, n_frames, 1) float32.
    """
    B, F, C = conditioning.shape
    assert C == 2 and init_state.shape == (B, F, 2)
    assert F >= 1

    thresh = RELEASE_DURATION * FRAME_RATE

    n = B * F
    rows = _ceil_div(n, LANES)

    if block_rows is None:
        # Aim for >= 2 grid steps so v7x's two TensorCores both get work via
        # dimension_semantics=("parallel",); keep blocks sublane-aligned and
        # capped so double-buffered tiles stay far below scoped-VMEM limits.
        block_rows = int(min(max(SUBLANES,
                                 _round_up(_ceil_div(rows, 2), SUBLANES)),
                             MAX_BLOCK_ROWS))
    else:
        block_rows = int(_round_up(max(block_rows, SUBLANES), SUBLANES))

    rows_pad = _round_up(rows, block_rows)
    n_pad = rows_pad * LANES

    def to_slab(x):
        # Channel slice + flatten + pad + reshape fuse into one cheap XLA copy
        # and present a fully lane-dense (rows_pad, 128) f32 slab to the kernel.
        flat = x.reshape(-1)
        flat = jnp.pad(flat, (0, n_pad - n))
        return flat.reshape(rows_pad, LANES)

    pitch = to_slab(conditioning[..., 0].astype(jnp.float32))
    note0 = to_slab(init_state[..., 0].astype(jnp.float32))
    steps0 = to_slab(init_state[..., 1].astype(jnp.float32))

    kernel = partial(_note_release_kernel,
                     last_step=float(F - 1), thresh=float(thresh))

    out2d = pl.pallas_call(
        kernel,
        out_shape=jax.ShapeDtypeStruct((rows_pad, LANES), jnp.float32),
        grid_spec=pltpu.PrefetchScalarGridSpec(
            num_scalar_prefetch=0,
            grid=(rows_pad // block_rows,),
            in_specs=[
                pl.BlockSpec((block_rows, LANES), lambda i: (i, 0)),
                pl.BlockSpec((block_rows, LANES), lambda i: (i, 0)),
                pl.BlockSpec((block_rows, LANES), lambda i: (i, 0)),
            ],
            out_specs=pl.BlockSpec((block_rows, LANES), lambda i: (i, 0)),
        ),
        compiler_params=pltpu.CompilerParams(
            dimension_semantics=("parallel",)),
    )(pitch, note0, steps0)

    return out2d.reshape(-1)[:n].reshape(B, F, 1)


def _reference(conditioning, init_state):
    """Pure-JAX transcription of the PyTorch NoteRelease / F0ProcessorCell loop
    (independent of the kernel's closed form)."""
    active_pitch = conditioning[..., 0:1]
    prev_note = init_state[..., 0:1]
    steps = init_state[..., 1:2]
    thresh = RELEASE_DURATION * FRAME_RATE
    extended = None
    for _ in range(conditioning.shape[1]):
        na = (active_pitch > 0).astype(jnp.float32)
        decay_end = 1.0 - (steps > thresh).astype(jnp.float32)
        extended = na * active_pitch + (1.0 - na) * decay_end * prev_note
        steps = (1.0 - na) * decay_end * (steps + 1.0)
        prev_note = extended
    return extended


if __name__ == "__main__":
    key = jax.random.PRNGKey(0)
    k_cond, k_state = jax.random.split(key)

    B, F = 8, 16  # small shapes consistent with (batch, n_frames, 2)

    # Conditioning with a mix of active (>0) and inactive (<=0) pitches.
    conditioning = jax.random.normal(k_cond, (B, F, 2), dtype=jnp.float32) * 40.0
    # Random previous_state (mimics torch.randn in the module's forward).
    # Scale the decayed-steps channel so both the "hold note" and the
    # "release to zero" branches are exercised (threshold here = 250 - 15).
    init_state = jax.random.normal(k_state, (B, F, 2), dtype=jnp.float32)
    init_state = init_state.at[..., 1].set(jnp.abs(init_state[..., 1]) * 200.0)

    fn = jax.jit(note_release)
    out = jax.block_until_ready(fn(conditioning, init_state))
    ref = _reference(conditioning, init_state)

    assert out.shape == (B, F, 1)
    assert jnp.allclose(out, ref, atol=1e-6, rtol=1e-6)

    print("KERNEL_OK")
</pallas_src>

<mosaic_0001>
module attributes {stable_mosaic.version = 11 : i64} {
  func.func @_note_release_kernel(%arg0: i32, %arg1: memref<8x128xf32, #tpu.memory_space<vmem>>, %arg2: memref<8x128xf32, #tpu.memory_space<vmem>>, %arg3: memref<8x128xf32, #tpu.memory_space<vmem>>, %arg4: memref<8x128xf32, #tpu.memory_space<vmem>>) attributes {dimension_semantics = [#tpu.dimension_semantics<parallel>], iteration_bounds = array<i64: 1>, scalar_prefetch = 0 : i64, scratch_operands = 0 : i64, tpu.core_type = #tpu.core_type<tc>, window_params = [{transform_indices = @transform_0, window_bounds = array<i64: 8, 128>}, {transform_indices = @transform_1, window_bounds = array<i64: 8, 128>}, {transform_indices = @transform_2, window_bounds = array<i64: 8, 128>}, {transform_indices = @transform_3, window_bounds = array<i64: 8, 128>}]} {
    %c0 = arith.constant 0 : index
    %c0_0 = arith.constant 0 : index
    %0 = vector.load %arg1[%c0, %c0_0] : memref<8x128xf32, #tpu.memory_space<vmem>>, vector<8x128xf32>
    %c0_1 = arith.constant 0 : index
    %c0_2 = arith.constant 0 : index
    %1 = vector.load %arg3[%c0_1, %c0_2] : memref<8x128xf32, #tpu.memory_space<vmem>>, vector<8x128xf32>
    %cst = arith.constant 1.500000e+01 : f32
    %2 = vector.broadcast %cst : f32 to vector<8x128xf32>
    %3 = arith.addf %1, %2 : vector<8x128xf32>
    %cst_3 = arith.constant 2.500000e+02 : f32
    %4 = vector.broadcast %cst_3 : f32 to vector<8x128xf32>
    %5 = arith.cmpf ogt, %3, %4 : vector<8x128xf32>
    %c0_4 = arith.constant 0 : index
    %c0_5 = arith.constant 0 : index
    %6 = vector.load %arg2[%c0_4, %c0_5] : memref<8x128xf32, #tpu.memory_space<vmem>>, vector<8x128xf32>
    %cst_6 = arith.constant 0.000000e+00 : f32
    %7 = vector.broadcast %cst_6 : f32 to vector<8x128xf32>
    %8 = arith.select %5, %7, %6 : vector<8x128xi1>, vector<8x128xf32>
    %cst_7 = arith.constant 0.000000e+00 : f32
    %9 = vector.broadcast %cst_7 : f32 to vector<8x128xf32>
    %10 = arith.cmpf ogt, %0, %9 : vector<8x128xf32>
    %11 = arith.select %10, %0, %8 : vector<8x128xi1>, vector<8x128xf32>
    %c0_8 = arith.constant 0 : index
    %c0_9 = arith.constant 0 : index
    %12 = vector.load %arg4[%c0_8, %c0_9] : memref<8x128xf32, #tpu.memory_space<vmem>>, vector<8x128xf32>
    tpu.vector_store %arg4[%c0_8, %c0_9], %11 {strides = array<i32>} : memref<8x128xf32, #tpu.memory_space<vmem>>, vector<8x128xf32>,
    return
  }
  func.func @transform_0(%arg0: i32) -> (i32, i32) {
    %c0_i32 = arith.constant 0 : i32
    %c0_i32_0 = arith.constant 0 : i32
    return %arg0, %c0_i32 : i32, i32
  }
  func.func @transform_1(%arg0: i32) -> (i32, i32) {
    %c0_i32 = arith.constant 0 : i32
    %c0_i32_0 = arith.constant 0 : i32
    return %arg0, %c0_i32 : i32, i32
  }
  func.func @transform_2(%arg0: i32) -> (i32, i32) {
    %c0_i32 = arith.constant 0 : i32
    %c0_i32_0 = arith.constant 0 : i32
    return %arg0, %c0_i32 : i32, i32
  }
  func.func @transform_3(%arg0: i32) -> (i32, i32) {
    %c0_i32 = arith.constant 0 : i32
    %c0_i32_0 = arith.constant 0 : i32
    return %arg0, %c0_i32 : i32, i32
  }
}

</mosaic_0001>

<llo_original>
// kernel: squeeze.3
$region0: #{squeeze.3}
  %s0 = inlined_call_operand.vmem [shape: f32[8,16], index: 0, kind: input, shape index: {}]
  %s1 = inlined_call_operand.vmem [shape: f32[128], index: 1, kind: output, shape index: {}]
  $region1: #{squeeze.3} parent=0
    #allocation0 [shape = 'u8[4096]{0}', space=vmem, size = 0x1000, scoped, tag = 'scoped mem for output reshape']
    %v2 = vld [vmem:[%s0] sm:$0x1]
    %vm3 = vcmask 130048
    %4 = vst.msk [vmem:[#allocation0] sm:$0x1] %vm3, %v2
    %s5 = scalar_lea.vmem %s0, 7
    %v6 = vld [vmem:[%s5] sm:$0x1]
    %7 = vrot.lane.b32.xlu0 %v6, 112
    %v8 = vpop.permute.xlu0 %7
    %vm9 = vcmask 1048448
    %10 = vst.msk [vmem:[#allocation0] sm:$0x1] %vm9, %v8
    %s11 = scalar_lea.vmem %s0, 6
    %v12 = vld [vmem:[%s11] sm:$0x1]
    %13 = vrot.lane.b32.xlu0 %v12, 96
    %v14 = vpop.permute.xlu0 %13
    %vm15 = vcmask 917248
    %16 = vst.msk [vmem:[#allocation0] sm:$0x1] %vm15, %v14
    %s17 = scalar_lea.vmem %s0, 5
    %v18 = vld [vmem:[%s17] sm:$0x1]
    %19 = vrot.lane.b32.xlu0 %v18, 80
    %v20 = vpop.permute.xlu0 %19
    %vm21 = vcmask 786048
    %22 = vst.msk [vmem:[#allocation0] sm:$0x1] %vm21, %v20
    %s23 = scalar_lea.vmem %s0, 4
    %v24 = vld [vmem:[%s23] sm:$0x1]
    %25 = vrot.lane.b32.xlu0 %v24, 64
    %v26 = vpop.permute.xlu0 %25
    %vm27 = vcmask 654848
    %28 = vst.msk [vmem:[#allocation0] sm:$0x1] %vm27, %v26
    %s29 = scalar_lea.vmem %s0, 3
    %v30 = vld [vmem:[%s29] sm:$0x1]
    %31 = vrot.lane.b32.xlu0 %v30, 48
    %v32 = vpop.permute.xlu0 %31
    %vm33 = vcmask 523648
    %34 = vst.msk [vmem:[#allocation0] sm:$0x1] %vm33, %v32
    %s35 = scalar_lea.vmem %s0, 2
    %v36 = vld [vmem:[%s35] sm:$0x1]
    %37 = vrot.lane.b32.xlu0 %v36, 32
    %v38 = vpop.permute.xlu0 %37
    %vm39 = vcmask 392448
    %40 = vst.msk [vmem:[#allocation0] sm:$0x1] %vm39, %v38
    %s41 = scalar_lea.vmem %s0, 1
    %v42 = vld [vmem:[%s41] sm:$0x1]
    %43 = vrot.lane.b32.xlu0 %v42, 16
    %v44 = vpop.permute.xlu0 %43
    %vm45 = vcmask 261248
    %46 = vst.msk [vmem:[#allocation0] sm:$0x1] %vm45, %v44
    %s48 = ssub.s32 2, 1
    %v49 = vld [vmem:[#allocation0] sm:%s48]
    %s51 = ssub.s32 2, 1
    %52 = vst [vmem:[%s1] sm:%s51] %v49

// kernel: note_release.1
$region0: #{note_release.1}
  #allocation0 [shape = 'u32[]', space=smem, size = 0x4, offset = 0x4, fixed_abs, tag = 'smem constant byte address 0x4 - core index']
  #allocation1 [shape = 'u32[72,128]{1,0:T(1,128)}', space=vmem, size = 0x9000, scoped, tag = 'internal scratch']
  %s0 = inlined_call_operand.vmem [shape: f32[8,128], index: 0, kind: input, shape index: {}]
  %s1 = inlined_call_operand.vmem [shape: f32[8,128], index: 1, kind: input, shape index: {}]
  %s2 = inlined_call_operand.vmem [shape: f32[8,128], index: 2, kind: input, shape index: {}]
  %s3 = inlined_call_operand.vmem [shape: f32[8,128], index: 3, kind: output, shape index: {}]
  %s4 = sld [smem:[#allocation0]]
  $region22: #{note_release.1} parent=0
    _
  %s6 = ssub.s32 1, %s4
  %s7 = scalar_select 0, %s6, %s4
  // Predicated region
  $region2: #{note_release.1} parent=0 // pred_check
    _
  $region3: #{note_release.1} parent=0 // pred_check_branch
    %9 = sbr.rel (0) target = $region5
  $region4: #{note_release.1} parent=0 // pred_region
    _
  $region5: #{note_release.1} parent=0 // pred_fallthru
    _
  // Predicated region
  $region6: #{note_release.1} parent=0 // pred_check
    _
  $region7: #{note_release.1} parent=0 // pred_check_branch
    %11 = sbr.rel (0) target = $region9
  $region8: #{note_release.1} parent=0 // pred_region
    _
  $region9: #{note_release.1} parent=0 // pred_fallthru
    _
  // Predicated region
  $region10: #{note_release.1} parent=0 // pred_check
    _
  $region11: #{note_release.1} parent=0 // pred_check_branch
    %13 = sbr.rel (0) target = $region13
  $region12: #{note_release.1} parent=0 // pred_region
    _
  $region13: #{note_release.1} parent=0 // pred_fallthru
    _
  %v14 = vld [vmem:[%s0] sm:$0xff]
  %v15 = vld [vmem:[%s2] sm:$0xff]
  %v16 = vadd.f32 %v15, 15.0
  %vm17 = vcmp.gt.f32.partialorder %v16, 250.0
  %v18 = vld [vmem:[%s1] sm:$0xff]
  %v19 = vsel %vm17, 0.0, %v18
  %vm20 = vcmp.gt.f32.partialorder %v14, 0.0
  %v21 = vsel %vm20, %v14, %v19
  %22 = vst [vmem:[%s3] sm:$0xff] %v21
  // Predicated region
  $region14: #{note_release.1} parent=0 // pred_check
    _
  $region15: #{note_release.1} parent=0 // pred_check_branch
    %24 = sbr.rel (0) target = $region17
  $region16: #{note_release.1} parent=0 // pred_region
    _
  $region17: #{note_release.1} parent=0 // pred_fallthru
    _
  // Predicated region
  $region18: #{note_release.1} parent=0 // pred_check
    _
  $region19: #{note_release.1} parent=0 // pred_check_branch
    %26 = sbr.rel (0) target = $region21
  $region20: #{note_release.1} parent=0 // pred_region
    _
  $region21: #{note_release.1} parent=0 // pred_fallthru
    _

</llo_original>
